<compile_context>
chip_gen: v7x
topology: tpu7x:2x2x1
jax: 0.10.0
libtpu: 0.0.40
codegen_flags: <defaults>
</compile_context>

<pallas_src>
import functools

import jax
import jax.numpy as jnp
from jax import lax
from jax.experimental import pallas as pl
from jax.experimental.pallas import tpu as pltpu


def _round_up(x, m):
    return (x + m - 1) // m * m


def _leaky_relu(x, slope=0.1):   # matches nn.LeakyReLU(0.1) in the spec
    return jnp.where(x > 0, x, slope * x)


# ---------------------------------------------------------------------------
# Kernel: fused twin-head MLP. Weights resident; batch tile streamed.
# ---------------------------------------------------------------------------
def _twin_q_kernel(s_ref, a_ref, w_ref, out_ref, *, S, A, HP):
    # s_ref:   (TB, S)   state tile (batch on sublanes)
    # a_ref:   (TB, A)   actions tile
    # w_ref:   (SP+AP+8+HP+8, HP)  packed bf16 weight slab (one resident DMA)
    # out_ref: (8, TB)   rows 0/1 = Q_a/Q_b, batch on lanes (lane-dense store)
    SP = _round_up(S, 8)
    AP = _round_up(A, 8)
    r_w1a = SP
    r_b1 = SP + AP
    r_w2 = SP + AP + 8
    r_w3 = r_w2 + HP

    s = s_ref[...].astype(jnp.bfloat16)                    # (TB, S)
    a = a_ref[...].astype(jnp.bfloat16)                    # (TB, A)

    w1s = w_ref[0:S, :]                                    # (S, HP)  bf16
    w1a = w_ref[r_w1a:r_w1a + A, :]                        # (A, HP)
    b1 = w_ref[r_b1:r_b1 + 1, :].astype(jnp.float32)       # (1, HP)  ones lane at col 2H
    w2t = w_ref[r_w2:r_w2 + HP, :]                         # (HP, HP) transposed, block-diag
    w3t = w_ref[r_w3:r_w3 + 8, :]                          # (8, HP)  rows 0/1 live

    # Layer 1 (batch on sublanes): h1 = [state | actions] @ W1 + b1   -> (TB, HP)
    h1 = jnp.dot(s, w1s, preferred_element_type=jnp.float32)
    h1 = h1 + jnp.dot(a, w1a, preferred_element_type=jnp.float32)
    h1 = h1 + b1                                           # bias row broadcasts over batch
    h1 = _leaky_relu(h1).astype(jnp.bfloat16)

    # Layer 2: move batch onto lanes.  h2T[j, b] = sum_k W2T[j, k] * h1[b, k]
    h2t = lax.dot_general(w2t, h1, (((1,), (1,)), ((), ())),
                          preferred_element_type=jnp.float32)        # (HP, TB)
    h2t = _leaky_relu(h2t).astype(jnp.bfloat16)

    # Layer 3: yT = W3T @ h2T  -> (8, TB); row 0 = Q_a, row 1 = Q_b.
    out_ref[...] = jnp.dot(w3t, h2t, preferred_element_type=jnp.float32)


# ---------------------------------------------------------------------------
# Parameter init (matches PyTorch nn.Linear default U(-1/sqrt(fan_in), ...))
# ---------------------------------------------------------------------------
def init_params(key, state_dim, action_dim, hidden=(512, 512)):
    dims = [state_dim + action_dim, hidden[0], hidden[1], 1]
    params = {}
    for head in ("a", "b"):
        for li in range(3):
            fan_in, fan_out = dims[li], dims[li + 1]
            bound = 1.0 / jnp.sqrt(jnp.float32(fan_in))
            key, kw, kb = jax.random.split(key, 3)
            params[f"w{li + 1}{head}"] = jax.random.uniform(
                kw, (fan_in, fan_out), jnp.float32, -bound, bound)
            params[f"b{li + 1}{head}"] = jax.random.uniform(
                kb, (fan_out,), jnp.float32, -bound, bound)
    return params


# ---------------------------------------------------------------------------
# One-time offline packing: fused, bias-folded, bf16 weight slab.
# ---------------------------------------------------------------------------
def pack_twin_q_params(params, state_dim, action_dim, hidden):
    # TODO(synk): fused packing only supports exactly two equal hidden layers
    # (the module's default); deeper hidden tuples would need more slab blocks.
    assert len(hidden) == 2 and hidden[0] == hidden[1]
    H = hidden[0]
    S, A = state_dim, action_dim
    SP = _round_up(S, 8)                 # row-block sizes keep slice starts 8-aligned
    AP = _round_up(A, 8)
    HP = _round_up(2 * H + 1, 128)       # fused hidden width (+1 ones lane), lane-dense

    # Layer 1, split into state rows / action rows; heads packed side-by-side.
    w1s = jnp.zeros((SP, HP), jnp.float32)
    w1s = w1s.at[:S, :H].set(params["w1a"][:S, :])
    w1s = w1s.at[:S, H:2 * H].set(params["w1b"][:S, :])

    w1a = jnp.zeros((AP, HP), jnp.float32)
    w1a = w1a.at[:A, :H].set(params["w1a"][S:, :])
    w1a = w1a.at[:A, H:2 * H].set(params["w1b"][S:, :])

    # Layer-1 bias row; column 2H == 1 creates the "ones lane" for layer-2/3 biases.
    b1 = jnp.zeros((8, HP), jnp.float32)
    b1 = b1.at[0, :H].set(params["b1a"])
    b1 = b1.at[0, H:2 * H].set(params["b1b"])
    b1 = b1.at[0, 2 * H].set(1.0)

    # Layer 2, transposed (out, in), block-diagonal heads; biases in column 2H.
    w2t = jnp.zeros((HP, HP), jnp.float32)
    w2t = w2t.at[:H, :H].set(params["w2a"].T)
    w2t = w2t.at[H:2 * H, H:2 * H].set(params["w2b"].T)
    w2t = w2t.at[:H, 2 * H].set(params["b2a"])
    w2t = w2t.at[H:2 * H, 2 * H].set(params["b2b"])
    w2t = w2t.at[2 * H, 2 * H].set(1.0)       # pass the ones lane through leaky_relu(1)=1

    # Layer 3, transposed: row 0 -> Q_a, row 1 -> Q_b; biases in column 2H.
    w3t = jnp.zeros((8, HP), jnp.float32)
    w3t = w3t.at[0, :H].set(params["w3a"][:, 0])
    w3t = w3t.at[1, H:2 * H].set(params["w3b"][:, 0])
    w3t = w3t.at[0, 2 * H].set(params["b3a"][0])
    w3t = w3t.at[1, 2 * H].set(params["b3b"][0])

    slab = jnp.concatenate([w1s, w1a, b1, w2t, w3t], axis=0)   # (SP+AP+8+HP+8, HP)
    return slab.astype(jnp.bfloat16)


# ---------------------------------------------------------------------------
# Forward wrapper.
# ---------------------------------------------------------------------------
def twin_q_forward(state, actions, w_slab, *, state_dim, action_dim, hidden,
                   block_b=1024):
    S, A = state_dim, action_dim
    H = hidden[0]
    HP = _round_up(2 * H + 1, 128)
    SP, AP = _round_up(S, 8), _round_up(A, 8)
    n_rows = SP + AP + 8 + HP + 8
    assert w_slab.shape == (n_rows, HP)
    assert state.shape[-1] == S and actions.shape[-1] == A
    B = state.shape[0]

    # Batch tile: lane-dense multiple of 128, big enough to amortize ~0.35us/step
    # grid overhead; for B >= 512 use >= 2 tiles so both v7x TensorCores get work.
    TB = min(block_b, _round_up(B, 128))
    if B >= 512:
        TB = min(TB, _round_up(pl.cdiv(B, 2), 128))
    grid = (pl.cdiv(B, TB),)        # partial last block is masked by Pallas; no jnp.pad

    kernel = functools.partial(_twin_q_kernel, S=S, A=A, HP=HP)
    out = pl.pallas_call(
        kernel,
        out_shape=jax.ShapeDtypeStruct((8, B), jnp.float32),
        grid=grid,
        in_specs=[
            pl.BlockSpec((TB, S), lambda i: (i, 0)),        # streamed state tile
            pl.BlockSpec((TB, A), lambda i: (i, 0)),        # streamed actions tile
            pl.BlockSpec((n_rows, HP), lambda i: (0, 0)),   # resident packed weights
        ],
        out_specs=pl.BlockSpec((8, TB), lambda i: (0, i)),  # batch on lanes (lane-dense)
        compiler_params=pltpu.CompilerParams(
            dimension_semantics=("parallel",),
        ),
    )(state, actions, w_slab)

    qa = out[0:1, :].T      # (B, 1)
    qb = out[1:2, :].T      # (B, 1)
    return qa, qb


# ---------------------------------------------------------------------------
# Pure-JAX reference (unfused, explicit biases, f32) for correctness checking.
# ---------------------------------------------------------------------------
def reference_forward(state, actions, params):
    x = jnp.concatenate([state, actions], axis=-1)

    def mlp(h, w1, b1, w2, b2, w3, b3):
        h = _leaky_relu(h @ w1 + b1)
        h = _leaky_relu(h @ w2 + b2)
        return h @ w3 + b3

    qa = mlp(x, params["w1a"], params["b1a"], params["w2a"], params["b2a"],
             params["w3a"], params["b3a"])
    qb = mlp(x, params["w1b"], params["b1b"], params["w2b"], params["b2b"],
             params["w3b"], params["b3b"])
    return qa, qb


if __name__ == "__main__":
    key = jax.random.PRNGKey(0)
    S, A = 12, 4
    HIDDEN = (32, 32)

    k_params, _ = jax.random.split(key)
    params = init_params(k_params, S, A, HIDDEN)
    w_slab = pack_twin_q_params(params, S, A, HIDDEN)

    fwd = jax.jit(functools.partial(
        twin_q_forward, state_dim=S, action_dim=A, hidden=HIDDEN))

    # B=8 exercises the single-tile / partial-block path; B=600 exercises the
    # multi-tile (grid=2) path with a partial last block.
    for B in (8, 600):
        ks, ka = jax.random.split(jax.random.fold_in(key, B))
        state = jax.random.normal(ks, (B, S), jnp.float32)
        actions = jax.random.normal(ka, (B, A), jnp.float32)

        qa, qb = fwd(state, actions, w_slab)
        jax.block_until_ready((qa, qb))

        ref_a, ref_b = reference_forward(state, actions, params)
        assert qa.shape == (B, 1) and qb.shape == (B, 1)
        # bf16 MXU operands -> tolerance loosened vs. the exact f32 reference.
        err_a = float(jnp.max(jnp.abs(qa - ref_a)))
        err_b = float(jnp.max(jnp.abs(qb - ref_b)))
        assert jnp.allclose(qa, ref_a, atol=5e-2, rtol=5e-2), err_a
        assert jnp.allclose(qb, ref_b, atol=5e-2, rtol=5e-2), err_b

    print("KERNEL_OK")
</pallas_src>

<mosaic_0001>
module attributes {stable_mosaic.version = 11 : i64} {
  func.func @_twin_q_kernel(%arg0: i32, %arg1: memref<128x12xf32, #tpu.memory_space<vmem>>, %arg2: memref<128x4xf32, #tpu.memory_space<vmem>>, %arg3: memref<168x128xbf16, #tpu.memory_space<vmem>>, %arg4: memref<8x128xf32, #tpu.memory_space<vmem>>) attributes {dimension_semantics = [#tpu.dimension_semantics<parallel>], iteration_bounds = array<i64: 1>, scalar_prefetch = 0 : i64, scratch_operands = 0 : i64, tpu.core_type = #tpu.core_type<tc>, window_params = [{transform_indices = @transform_0, window_bounds = array<i64: 128, 12>}, {transform_indices = @transform_1, window_bounds = array<i64: 128, 4>}, {pipeline_mode = #tpu.pipeline_mode<synchronous>, transform_indices = @transform_2, window_bounds = array<i64: 168, 128>}, {transform_indices = @transform_3, window_bounds = array<i64: 8, 128>}]} {
    %c0 = arith.constant 0 : index
    %c0_0 = arith.constant 0 : index
    %0 = vector.load %arg1[%c0, %c0_0] : memref<128x12xf32, #tpu.memory_space<vmem>>, vector<128x12xf32>
    %1 = arith.truncf %0 : vector<128x12xf32> to vector<128x12xbf16>
    %c0_1 = arith.constant 0 : index
    %c0_2 = arith.constant 0 : index
    %2 = vector.load %arg2[%c0_1, %c0_2] : memref<128x4xf32, #tpu.memory_space<vmem>>, vector<128x4xf32>
    %3 = arith.truncf %2 : vector<128x4xf32> to vector<128x4xbf16>
    %c0_3 = arith.constant 0 : index
    %c0_4 = arith.constant 0 : index
    %4 = vector.load %arg3[%c0_3, %c0_4] : memref<168x128xbf16, #tpu.memory_space<vmem>>, vector<12x128xbf16>
    %c16 = arith.constant 16 : index
    %c0_5 = arith.constant 0 : index
    %5 = vector.load %arg3[%c16, %c0_5] : memref<168x128xbf16, #tpu.memory_space<vmem>>, vector<4x128xbf16>
    %c24 = arith.constant 24 : index
    %c0_6 = arith.constant 0 : index
    %6 = vector.load %arg3[%c24, %c0_6] : memref<168x128xbf16, #tpu.memory_space<vmem>>, vector<1x128xbf16>
    %7 = arith.extf %6 : vector<1x128xbf16> to vector<1x128xf32>
    %c32 = arith.constant 32 : index
    %c0_7 = arith.constant 0 : index
    %8 = vector.load %arg3[%c32, %c0_7] : memref<168x128xbf16, #tpu.memory_space<vmem>>, vector<128x128xbf16>
    %c160 = arith.constant 160 : index
    %c0_8 = arith.constant 0 : index
    %9 = vector.load %arg3[%c160, %c0_8] : memref<168x128xbf16, #tpu.memory_space<vmem>>, vector<8x128xbf16>
    %cst = arith.constant dense<0.000000e+00> : vector<128x128xf32>
    %10 = tpu.matmul %1, %4, %cst {dimension_numbers = #tpu.dot_dimension_numbers<[1], [0], [0], [1], [0, 0, 1, 1], [], []>} : vector<128x12xbf16>, vector<12x128xbf16>, vector<128x128xf32> -> vector<128x128xf32>
    %cst_9 = arith.constant dense<0.000000e+00> : vector<128x128xf32>
    %11 = tpu.matmul %3, %5, %cst_9 {dimension_numbers = #tpu.dot_dimension_numbers<[1], [0], [0], [1], [0, 0, 1, 1], [], []>} : vector<128x4xbf16>, vector<4x128xbf16>, vector<128x128xf32> -> vector<128x128xf32>
    %12 = arith.addf %10, %11 : vector<128x128xf32>
    %13 = vector.broadcast %7 : vector<1x128xf32> to vector<128x128xf32>
    %14 = arith.addf %12, %13 : vector<128x128xf32>
    %cst_10 = arith.constant 0.000000e+00 : f32
    %15 = vector.broadcast %cst_10 : f32 to vector<128x128xf32>
    %16 = arith.cmpf ogt, %14, %15 : vector<128x128xf32>
    %cst_11 = arith.constant 1.000000e-01 : f32
    %17 = vector.broadcast %cst_11 : f32 to vector<128x128xf32>
    %18 = arith.mulf %17, %14 : vector<128x128xf32>
    %19 = arith.select %16, %14, %18 : vector<128x128xi1>, vector<128x128xf32>
    %20 = arith.truncf %19 : vector<128x128xf32> to vector<128x128xbf16>
    %cst_12 = arith.constant dense<0.000000e+00> : vector<128x128xf32>
    %21 = tpu.matmul %8, %20, %cst_12 {dimension_numbers = #tpu.dot_dimension_numbers<[1], [1], [0], [0], [0, 0, 1, 0], [], []>} : vector<128x128xbf16>, vector<128x128xbf16>, vector<128x128xf32> -> vector<128x128xf32>
    %cst_13 = arith.constant 0.000000e+00 : f32
    %22 = vector.broadcast %cst_13 : f32 to vector<128x128xf32>
    %23 = arith.cmpf ogt, %21, %22 : vector<128x128xf32>
    %cst_14 = arith.constant 1.000000e-01 : f32
    %24 = vector.broadcast %cst_14 : f32 to vector<128x128xf32>
    %25 = arith.mulf %24, %21 : vector<128x128xf32>
    %26 = arith.select %23, %21, %25 : vector<128x128xi1>, vector<128x128xf32>
    %27 = arith.truncf %26 : vector<128x128xf32> to vector<128x128xbf16>
    %cst_15 = arith.constant dense<0.000000e+00> : vector<8x128xf32>
    %28 = tpu.matmul %9, %27, %cst_15 {dimension_numbers = #tpu.dot_dimension_numbers<[1], [0], [0], [1], [0, 0, 1, 1], [], []>} : vector<8x128xbf16>, vector<128x128xbf16>, vector<8x128xf32> -> vector<8x128xf32>
    %c0_16 = arith.constant 0 : index
    %c0_17 = arith.constant 0 : index
    %29 = vector.load %arg4[%c0_16, %c0_17] : memref<8x128xf32, #tpu.memory_space<vmem>>, vector<8x128xf32>
    tpu.vector_store %arg4[%c0_16, %c0_17], %28 {strides = array<i32>} : memref<8x128xf32, #tpu.memory_space<vmem>>, vector<8x128xf32>,
    return
  }
  func.func @transform_0(%arg0: i32) -> (i32, i32) {
    %c0_i32 = arith.constant 0 : i32
    %c0_i32_0 = arith.constant 0 : i32
    return %arg0, %c0_i32 : i32, i32
  }
  func.func @transform_1(%arg0: i32) -> (i32, i32) {
    %c0_i32 = arith.constant 0 : i32
    %c0_i32_0 = arith.constant 0 : i32
    return %arg0, %c0_i32 : i32, i32
  }
  func.func @transform_2(%arg0: i32) -> (i32, i32) {
    %c0_i32 = arith.constant 0 : i32
    %c0_i32_0 = arith.constant 0 : i32
    %c0_i32_1 = arith.constant 0 : i32
    return %c0_i32, %c0_i32_0 : i32, i32
  }
  func.func @transform_3(%arg0: i32) -> (i32, i32) {
    %c0_i32 = arith.constant 0 : i32
    %c0_i32_0 = arith.constant 0 : i32
    return %c0_i32, %arg0 : i32, i32
  }
}

</mosaic_0001>

<llo_original>
// kernel: twin_q_forward.1
$region0: #{twin_q_forward.1}
  #allocation0 [shape = 'u32[]', space=smem, size = 0x4, offset = 0x4, fixed_abs, tag = 'smem constant byte address 0x4 - core index']
  #allocation1 [shape = 'u32[144,128]{1,0:T(1,128)}', space=vmem, size = 0x12000, scoped, tag = 'internal scratch']
  %s0 = inlined_call_operand.vmem [shape: f32[8,12], index: 0, kind: input, shape index: {}]
  %s1 = inlined_call_operand.vmem [shape: f32[8,4], index: 1, kind: input, shape index: {}]
  %s2 = inlined_call_operand.hbm [shape: bf16[168,128], index: 2, kind: input, shape index: {}]
  %s3 = inlined_call_operand.vmem [shape: f32[8,8], index: 3, kind: output, shape index: {}]
  %s4 = sld [smem:[#allocation0]]
  $region26: #{twin_q_forward.1} parent=0
    _
  %s6 = ssub.s32 1, %s4
  %s7 = scalar_select 0, %s6, %s4
  $region1: #{twin_q_forward.1} parent=0
    #allocation2 [shape = 'u8[43008]{0}', space=vmem, size = 0xa800, scoped, tag = 'input window, operand 2, single buffered']
    #allocation3 [shape = 's32[1]{0}', space=sflag, size = 0x4, scoped, tag = 'scoped memory for twin_q_forward.1']
    %8 = vsyncpa [#allocation3], 0
    // Predicated region
    $region2: #{twin_q_forward.1} parent=1 // pred_check
      _
    $region3: #{twin_q_forward.1} parent=1 // pred_check_branch
      %10 = sbr.rel (0) target = $region5
    $region4: #{twin_q_forward.1} parent=1 // pred_region
      _
    $region5: #{twin_q_forward.1} parent=1 // pred_fallthru
      _
    // Predicated region
    $region6: #{twin_q_forward.1} parent=1 // pred_check
      _
    $region7: #{twin_q_forward.1} parent=1 // pred_check_branch
      %12 = sbr.rel (0) target = $region9
    $region8: #{twin_q_forward.1} parent=1 // pred_region
      _
    $region9: #{twin_q_forward.1} parent=1 // pred_fallthru
      _
    // Predicated region
    $region10: #{twin_q_forward.1} parent=1 // pred_check
      _
    $region11: #{twin_q_forward.1} parent=1 // pred_check_branch
      %14 = sbr.rel (0) target = $region13
    $region12: #{twin_q_forward.1} parent=1 // pred_region
      %s16 = ssub.s32 1344, 1344
      %17 = vsyncadd [#allocation3], %s16
      %s18 = sshll.u32 [#allocation2], 4
      %s19 = int_to_ptr.vmem [resolvable:$true] %s18
      %24 = dma.hbm_to_vmem [thread:$0]  %s2, 1344, %s19, [#allocation3], 64, 64, 4
    $region13: #{twin_q_forward.1} parent=1 // pred_fallthru
      _
    // Predicated region
    $region14: #{twin_q_forward.1} parent=1 // pred_check
      _
    $region15: #{twin_q_forward.1} parent=1 // pred_check_branch
      %26 = sbr.rel (0) target = $region17
    $region16: #{twin_q_forward.1} parent=1 // pred_region
      %27 = dma.done [#allocation3], 1344
    $region17: #{twin_q_forward.1} parent=1 // pred_fallthru
      _
    %v29 = vld [vmem:[%s0] sm:$0xff]
    %v30 = vld [vmem:[%s0 + $0x8] sm:$0xff]
    %v31 = vld [vmem:[%s0 + $0x10] sm:$0xff]
    %v32 = vld [vmem:[%s0 + $0x18] sm:$0xff]
    %v33 = vld [vmem:[%s0 + $0x20] sm:$0xff]
    %v34 = vld [vmem:[%s0 + $0x28] sm:$0xff]
    %v35 = vld [vmem:[%s0 + $0x30] sm:$0xff]
    %v36 = vld [vmem:[%s0 + $0x38] sm:$0xff]
    %v37 = vld [vmem:[%s0 + $0x40] sm:$0xff]
    %v38 = vld [vmem:[%s0 + $0x48] sm:$0xff]
    %v39 = vld [vmem:[%s0 + $0x50] sm:$0xff]
    %v40 = vld [vmem:[%s0 + $0x58] sm:$0xff]
    %v41 = vld [vmem:[%s0 + $0x60] sm:$0xff]
    %v42 = vld [vmem:[%s0 + $0x68] sm:$0xff]
    %v43 = vld [vmem:[%s0 + $0x70] sm:$0xff]
    %v44 = vld [vmem:[%s0 + $0x78] sm:$0xff]
    %v45 = vpack.c.bf16 %v30, %v29
    %v46 = vpack.c.bf16 %v32, %v31
    %v47 = vpack.c.bf16 %v34, %v33
    %v48 = vpack.c.bf16 %v36, %v35
    %v49 = vpack.c.bf16 %v38, %v37
    %v50 = vpack.c.bf16 %v40, %v39
    %v51 = vpack.c.bf16 %v42, %v41
    %v52 = vpack.c.bf16 %v44, %v43
    %v53 = vld [vmem:[%s1] sm:$0xff]
    %v54 = vld [vmem:[%s1 + $0x8] sm:$0xff]
    %v55 = vld [vmem:[%s1 + $0x10] sm:$0xff]
    %v56 = vld [vmem:[%s1 + $0x18] sm:$0xff]
    %v57 = vld [vmem:[%s1 + $0x20] sm:$0xff]
    %v58 = vld [vmem:[%s1 + $0x28] sm:$0xff]
    %v59 = vld [vmem:[%s1 + $0x30] sm:$0xff]
    %v60 = vld [vmem:[%s1 + $0x38] sm:$0xff]
    %v61 = vld [vmem:[%s1 + $0x40] sm:$0xff]
    %v62 = vld [vmem:[%s1 + $0x48] sm:$0xff]
    %v63 = vld [vmem:[%s1 + $0x50] sm:$0xff]
    %v64 = vld [vmem:[%s1 + $0x58] sm:$0xff]
    %v65 = vld [vmem:[%s1 + $0x60] sm:$0xff]
    %v66 = vld [vmem:[%s1 + $0x68] sm:$0xff]
    %v67 = vld [vmem:[%s1 + $0x70] sm:$0xff]
    %v68 = vld [vmem:[%s1 + $0x78] sm:$0xff]
    %v69 = vpack.c.bf16 %v54, %v53
    %v70 = vpack.c.bf16 %v56, %v55
    %v71 = vpack.c.bf16 %v58, %v57
    %v72 = vpack.c.bf16 %v60, %v59
    %v73 = vpack.c.bf16 %v62, %v61
    %v74 = vpack.c.bf16 %v64, %v63
    %v75 = vpack.c.bf16 %v66, %v65
    %v76 = vpack.c.bf16 %v68, %v67
    %v77 = vld [vmem:[#allocation2] sm:$0xf]
    %v78 = vld [vmem:[#allocation2 + $0x4] sm:$0x3]
    %v79 = vld [vmem:[#allocation2 + $0x8] sm:$0x3]
    %v80 = vld [vmem:[#allocation2 + $0xc] sm:$0x1]
    %v81 = vunpack.c.l.bf16 %v80
    %v82 = vld [vmem:[#allocation2 + $0x10] sm:$0xf]
    %v83 = vld [vmem:[#allocation2 + $0x14] sm:$0xf]
    %v84 = vld [vmem:[#allocation2 + $0x18] sm:$0xf]
    %v85 = vld [vmem:[#allocation2 + $0x1c] sm:$0xf]
    %v86 = vld [vmem:[#allocation2 + $0x20] sm:$0xf]
    %v87 = vld [vmem:[#allocation2 + $0x24] sm:$0xf]
    %v88 = vld [vmem:[#allocation2 + $0x28] sm:$0xf]
    %v89 = vld [vmem:[#allocation2 + $0x2c] sm:$0xf]
    %v90 = vld [vmem:[#allocation2 + $0x30] sm:$0xf]
    %v91 = vld [vmem:[#allocation2 + $0x34] sm:$0xf]
    %v92 = vld [vmem:[#allocation2 + $0x38] sm:$0xf]
    %v93 = vld [vmem:[#allocation2 + $0x3c] sm:$0xf]
    %v94 = vld [vmem:[#allocation2 + $0x40] sm:$0xf]
    %v95 = vld [vmem:[#allocation2 + $0x44] sm:$0xf]
    %v96 = vld [vmem:[#allocation2 + $0x48] sm:$0xf]
    %v97 = vld [vmem:[#allocation2 + $0x4c] sm:$0xf]
    %v98 = vld [vmem:[#allocation2 + $0x50] sm:$0xf]
    %vm99 = vcmask 31744
    %v101 = vsel %vm99, %v69, 0
    %v104 = vsel %vm99, %v70, 0
    %v107 = vsel %vm99, %v71, 0
    %v110 = vsel %vm99, %v72, 0
    %v113 = vsel %vm99, %v73, 0
    %v116 = vsel %vm99, %v74, 0
    %v119 = vsel %vm99, %v75, 0
    %v122 = vsel %vm99, %v76, 0
    %vm124 = vcmask 1041408
    %v126 = vsel %vm124, %v79, 0
    %128 = vmatprep.subr.bf16.mxu0 0
    %129 = vmatpush1.bf16.msra.mxu0 %v126
    %130 = vmatprep.subr.bf16.mxu0 0
    %131 = vmatpush1.bf16.msra.mxu0 0
    %132 = vmatprep.subr.bf16.mxu0 0
    %133 = vmatpush1.bf16.msra.mxu0 0
    %134 = vmatprep.subr.bf16.mxu0 0
    %135 = vmatpush1.bf16.msra.mxu0 0
    %136 = vmatprep.subr.bf16.mxu0 0
    %137 = vmatpush1.bf16.msra.mxu0 0
    %138 = vmatprep.subr.bf16.mxu0 0
    %139 = vmatpush1.bf16.msra.mxu0 0
    %140 = vmatprep.subr.bf16.mxu0 0
    %141 = vmatpush1.bf16.msra.mxu0 0
    %142 = vmatprep.subr.bf16.mxu0 0
    %143 = vmatpush1.bf16.msra.mxu0 0
    %144 = vmatprep.subr.bf16.mxu0 0
    %145 = vmatpush1.bf16.msra.mxu0 0
    %146 = vmatprep.subr.bf16.mxu0 0
    %147 = vmatpush1.bf16.msra.mxu0 0
    %148 = vmatprep.subr.bf16.mxu0 0
    %149 = vmatpush1.bf16.msra.mxu0 0
    %150 = vmatprep.subr.bf16.mxu0 0
    %151 = vmatpush1.bf16.msra.mxu0 0
    %152 = vmatprep.subr.bf16.mxu0 0
    %153 = vmatpush1.bf16.msra.mxu0 0
    %154 = vmatprep.subr.bf16.mxu0 0
    %155 = vmatpush1.bf16.msra.mxu0 0
    %156 = vmatprep.subr.bf16.mxu0 0
    %157 = vmatpush1.bf16.msra.mxu0 0
    %158 = vmatprep.subr.bf16.mxu0 0
    %159 = vmatpush1.bf16.msra.mxu0 0
    %160 = vmatprep.mubr.bf16.mxu0 0
    %161 = vmatmul.mubr.bf16.gmra.mrb[0].mxu0 %v101
    %v162 = vpop.f32.mrb[0].mxu0
    %v163 = vadd.f32 0.0, %v162
    %v164 = vpop.f32.mrb[0].mxu0
    %v165 = vpop.f32.mrb[0].mxu0
    %v166 = vadd.f32 0.0, %v165
    %v167 = vpop.f32.mrb[0].mxu0
    %168 = vmatprep.mubr.bf16.mxu0 0
    %169 = vmatmul.mubr.bf16.gmra.mrb[0].mxu0 %v104
    %v170 = vpop.f32.mrb[0].mxu0
    %v171 = vadd.f32 0.0, %v170
    %v172 = vpop.f32.mrb[0].mxu0
    %v173 = vpop.f32.mrb[0].mxu0
    %v174 = vadd.f32 0.0, %v173
    %v175 = vpop.f32.mrb[0].mxu0
    %176 = vmatprep.mubr.bf16.mxu0 0
    %177 = vmatmul.mubr.bf16.gmra.mrb[0].mxu0 %v107
    %v178 = vpop.f32.mrb[0].mxu0
    %v179 = vadd.f32 0.0, %v178
    %v180 = vpop.f32.mrb[0].mxu0
    %v181 = vpop.f32.mrb[0].mxu0
    %v182 = vadd.f32 0.0, %v181
    %v183 = vpop.f32.mrb[0].mxu0
    %184 = vmatprep.mubr.bf16.mxu0 0
    %185 = vmatmul.mubr.bf16.gmra.mrb[0].mxu0 %v110
    %v186 = vpop.f32.mrb[0].mxu0
    %v187 = vadd.f32 0.0, %v186
    %v188 = vpop.f32.mrb[0].mxu0
    %v189 = vpop.f32.mrb[0].mxu0
    %v190 = vadd.f32 0.0, %v189
    %v191 = vpop.f32.mrb[0].mxu0
    %192 = vmatprep.mubr.bf16.mxu0 0
    %193 = vmatmul.mubr.bf16.gmra.mrb[0].mxu0 %v113
    %v194 = vpop.f32.mrb[0].mxu0
    %v195 = vadd.f32 0.0, %v194
    %v196 = vpop.f32.mrb[0].mxu0
    %v197 = vpop.f32.mrb[0].mxu0
    %v198 = vadd.f32 0.0, %v197
    %v199 = vpop.f32.mrb[0].mxu0
    %200 = vmatprep.mubr.bf16.mxu0 0
    %201 = vmatmul.mubr.bf16.gmra.mrb[0].mxu0 %v116
    %v202 = vpop.f32.mrb[0].mxu0
    %v203 = vadd.f32 0.0, %v202
    %v204 = vpop.f32.mrb[0].mxu0
    %v205 = vpop.f32.mrb[0].mxu0
    %v206 = vadd.f32 0.0, %v205
    %v207 = vpop.f32.mrb[0].mxu0
    %208 = vmatprep.mubr.bf16.mxu0 0
    %209 = vmatmul.mubr.bf16.gmra.mrb[0].mxu0 %v119
    %v210 = vpop.f32.mrb[0].mxu0
    %v211 = vadd.f32 0.0, %v210
    %v212 = vpop.f32.mrb[0].mxu0
    %v213 = vpop.f32.mrb[0].mxu0
    %v214 = vadd.f32 0.0, %v213
    %v215 = vpop.f32.mrb[0].mxu0
    %216 = vmatprep.mubr.bf16.mxu0 0
    %217 = vmatmul.mubr.bf16.gmra.mrb[0].mxu0 %v122
    %v218 = vpop.f32.mrb[0].mxu0
    %v219 = vadd.f32 0.0, %v218
    %v220 = vpop.f32.mrb[0].mxu0
    %v221 = vpop.f32.mrb[0].mxu0
    %v222 = vadd.f32 0.0, %v221
    %v223 = vpop.f32.mrb[0].mxu0
    %224 = vdwg.mxu0
    %v227 = vunpack.c.l.b16 %v77
    %v228 = vunpack.c.l.b16 %v78
    %v229 = vpack.c.b16 %v228, %v227
    %vm230 = vcmask 97280
    %v232 = vsel %vm230, %v45, 0
    %v235 = vsel %vm230, %v46, 0
    %v238 = vsel %vm230, %v47, 0
    %v241 = vsel %vm230, %v48, 0
    %v244 = vsel %vm230, %v49, 0
    %v247 = vsel %vm230, %v50, 0
    %v250 = vsel %vm230, %v51, 0
    %v253 = vsel %vm230, %v52, 0
    %vm255 = vcmask 1045504
    %v257 = vsel %vm255, %v229, 0
    %259 = vmatprep.subr.bf16.mxu0 0
    %260 = vmatpush1.bf16.msra.mxu0 %v257
    %261 = vmatprep.subr.bf16.mxu0 0
    %262 = vmatpush1.bf16.msra.mxu0 0
    %263 = vmatprep.subr.bf16.mxu0 0
    %264 = vmatpush1.bf16.msra.mxu0 0
    %265 = vmatprep.subr.bf16.mxu0 0
    %266 = vmatpush1.bf16.msra.mxu0 0
    %267 = vmatprep.subr.bf16.mxu0 0
    %268 = vmatpush1.bf16.msra.mxu0 0
    %269 = vmatprep.subr.bf16.mxu0 0
    %270 = vmatpush1.bf16.msra.mxu0 0
    %271 = vmatprep.subr.bf16.mxu0 0
    %272 = vmatpush1.bf16.msra.mxu0 0
    %273 = vmatprep.subr.bf16.mxu0 0
    %274 = vmatpush1.bf16.msra.mxu0 0
    %275 = vmatprep.subr.bf16.mxu0 0
    %276 = vmatpush1.bf16.msra.mxu0 0
    %277 = vmatprep.subr.bf16.mxu0 0
    %278 = vmatpush1.bf16.msra.mxu0 0
    %279 = vmatprep.subr.bf16.mxu0 0
    %280 = vmatpush1.bf16.msra.mxu0 0
    %281 = vmatprep.subr.bf16.mxu0 0
    %282 = vmatpush1.bf16.msra.mxu0 0
    %283 = vmatprep.subr.bf16.mxu0 0
    %284 = vmatpush1.bf16.msra.mxu0 0
    %285 = vmatprep.subr.bf16.mxu0 0
    %286 = vmatpush1.bf16.msra.mxu0 0
    %287 = vmatprep.subr.bf16.mxu0 0
    %288 = vmatpush1.bf16.msra.mxu0 0
    %289 = vmatprep.subr.bf16.mxu0 0
    %290 = vmatpush1.bf16.msra.mxu0 0
    %291 = vmatprep.mubr.bf16.mxu0 0
    %292 = vmatmul.mubr.bf16.gmra.mrb[0].mxu0 %v232
    %v293 = vpop.f32.mrb[0].mxu0
    %v294 = vadd.f32 %v163, %v293
    %v295 = vpop.f32.mrb[0].mxu0
    %v296 = vpop.f32.mrb[0].mxu0
    %v297 = vadd.f32 %v166, %v296
    %v298 = vpop.f32.mrb[0].mxu0
    %299 = vmatprep.mubr.bf16.mxu0 0
    %300 = vmatmul.mubr.bf16.gmra.mrb[0].mxu0 %v235
    %v301 = vpop.f32.mrb[0].mxu0
    %v302 = vadd.f32 %v171, %v301
    %v303 = vpop.f32.mrb[0].mxu0
    %v304 = vpop.f32.mrb[0].mxu0
    %v305 = vadd.f32 %v174, %v304
    %v306 = vpop.f32.mrb[0].mxu0
    %307 = vmatprep.mubr.bf16.mxu0 0
    %308 = vmatmul.mubr.bf16.gmra.mrb[0].mxu0 %v238
    %v309 = vpop.f32.mrb[0].mxu0
    %v310 = vadd.f32 %v179, %v309
    %v311 = vpop.f32.mrb[0].mxu0
    %v312 = vpop.f32.mrb[0].mxu0
    %v313 = vadd.f32 %v182, %v312
    %v314 = vpop.f32.mrb[0].mxu0
    %315 = vmatprep.mubr.bf16.mxu0 0
    %316 = vmatmul.mubr.bf16.gmra.mrb[0].mxu0 %v241
    %v317 = vpop.f32.mrb[0].mxu0
    %v318 = vadd.f32 %v187, %v317
    %v319 = vpop.f32.mrb[0].mxu0
    %v320 = vpop.f32.mrb[0].mxu0
    %v321 = vadd.f32 %v190, %v320
    %v322 = vpop.f32.mrb[0].mxu0
    %323 = vmatprep.mubr.bf16.mxu0 0
    %324 = vmatmul.mubr.bf16.gmra.mrb[0].mxu0 %v244
    %v325 = vpop.f32.mrb[0].mxu0
    %v326 = vadd.f32 %v195, %v325
    %v327 = vpop.f32.mrb[0].mxu0
    %v328 = vpop.f32.mrb[0].mxu0
    %v329 = vadd.f32 %v198, %v328
    %v330 = vpop.f32.mrb[0].mxu0
    %331 = vmatprep.mubr.bf16.mxu0 0
    %332 = vmatmul.mubr.bf16.gmra.mrb[0].mxu0 %v247
    %v333 = vpop.f32.mrb[0].mxu0
    %v334 = vadd.f32 %v203, %v333
    %v335 = vpop.f32.mrb[0].mxu0
    %v336 = vpop.f32.mrb[0].mxu0
    %v337 = vadd.f32 %v206, %v336
    %v338 = vpop.f32.mrb[0].mxu0
    %339 = vmatprep.mubr.bf16.mxu0 0
    %340 = vmatmul.mubr.bf16.gmra.mrb[0].mxu0 %v250
    %v341 = vpop.f32.mrb[0].mxu0
    %v342 = vadd.f32 %v211, %v341
    %v343 = vpop.f32.mrb[0].mxu0
    %v344 = vpop.f32.mrb[0].mxu0
    %v345 = vadd.f32 %v214, %v344
    %v346 = vpop.f32.mrb[0].mxu0
    %347 = vmatprep.mubr.bf16.mxu0 0
    %348 = vmatmul.mubr.bf16.gmra.mrb[0].mxu0 %v253
    %v349 = vpop.f32.mrb[0].mxu0
    %v350 = vadd.f32 %v219, %v349
    %v351 = vpop.f32.mrb[0].mxu0
    %v352 = vpop.f32.mrb[0].mxu0
    %v353 = vadd.f32 %v222, %v352
    %v354 = vpop.f32.mrb[0].mxu0
    %355 = vdwg.mxu0
    %v356 = vlaneseq
    %v357 = vshrl.u32 %v356, 7
    %v358 = vsub.s32 0, %v357
    %v359 = vrot.slane %v81, %v358
    %v360 = vadd.f32 %v294, %v359
    %v361 = vadd.f32 %v297, %v359
    %v362 = vadd.f32 %v302, %v359
    %v363 = vadd.f32 %v305, %v359
    %v364 = vadd.f32 %v310, %v359
    %v365 = vadd.f32 %v313, %v359
    %v366 = vadd.f32 %v318, %v359
    %v367 = vadd.f32 %v321, %v359
    %v368 = vadd.f32 %v326, %v359
    %v369 = vadd.f32 %v329, %v359
    %v370 = vadd.f32 %v334, %v359
    %v371 = vadd.f32 %v337, %v359
    %v372 = vadd.f32 %v342, %v359
    %v373 = vadd.f32 %v345, %v359
    %v374 = vadd.f32 %v350, %v359
    %v375 = vadd.f32 %v353, %v359
    %vm376 = vcmp.gt.f32.partialorder %v360, 0.0
    %vm377 = vcmp.gt.f32.partialorder %v361, 0.0
    %vm378 = vcmp.gt.f32.partialorder %v362, 0.0
    %vm379 = vcmp.gt.f32.partialorder %v363, 0.0
    %vm380 = vcmp.gt.f32.partialorder %v364, 0.0
    %vm381 = vcmp.gt.f32.partialorder %v365, 0.0
    %vm382 = vcmp.gt.f32.partialorder %v366, 0.0
    %vm383 = vcmp.gt.f32.partialorder %v367, 0.0
    %vm384 = vcmp.gt.f32.partialorder %v368, 0.0
    %vm385 = vcmp.gt.f32.partialorder %v369, 0.0
    %vm386 = vcmp.gt.f32.partialorder %v370, 0.0
    %vm387 = vcmp.gt.f32.partialorder %v371, 0.0
    %vm388 = vcmp.gt.f32.partialorder %v372, 0.0
    %vm389 = vcmp.gt.f32.partialorder %v373, 0.0
    %vm390 = vcmp.gt.f32.partialorder %v374, 0.0
    %vm391 = vcmp.gt.f32.partialorder %v375, 0.0
    %v392 = vmul.f32 %v360, 0.1
    %v393 = vmul.f32 %v361, 0.1
    %v394 = vmul.f32 %v362, 0.1
    %v395 = vmul.f32 %v363, 0.1
    %v396 = vmul.f32 %v364, 0.1
    %v397 = vmul.f32 %v365, 0.1
    %v398 = vmul.f32 %v366, 0.1
    %v399 = vmul.f32 %v367, 0.1
    %v400 = vmul.f32 %v368, 0.1
    %v401 = vmul.f32 %v369, 0.1
    %v402 = vmul.f32 %v370, 0.1
    %v403 = vmul.f32 %v371, 0.1
    %v404 = vmul.f32 %v372, 0.1
    %v405 = vmul.f32 %v373, 0.1
    %v406 = vmul.f32 %v374, 0.1
    %v407 = vmul.f32 %v375, 0.1
    %v408 = vsel %vm376, %v360, %v392
    %v409 = vsel %vm377, %v361, %v393
    %v410 = vsel %vm378, %v362, %v394
    %v411 = vsel %vm379, %v363, %v395
    %v412 = vsel %vm380, %v364, %v396
    %v413 = vsel %vm381, %v365, %v397
    %v414 = vsel %vm382, %v366, %v398
    %v415 = vsel %vm383, %v367, %v399
    %v416 = vsel %vm384, %v368, %v400
    %v417 = vsel %vm385, %v369, %v401
    %v418 = vsel %vm386, %v370, %v402
    %v419 = vsel %vm387, %v371, %v403
    %v420 = vsel %vm388, %v372, %v404
    %v421 = vsel %vm389, %v373, %v405
    %v422 = vsel %vm390, %v374, %v406
    %v423 = vsel %vm391, %v375, %v407
    %v424 = vpack.c.bf16 %v409, %v408
    %v425 = vpack.c.bf16 %v411, %v410
    %v426 = vpack.c.bf16 %v413, %v412
    %v427 = vpack.c.bf16 %v415, %v414
    %v428 = vpack.c.bf16 %v417, %v416
    %v429 = vpack.c.bf16 %v419, %v418
    %v430 = vpack.c.bf16 %v421, %v420
    %v431 = vpack.c.bf16 %v423, %v422
    %v448 = vunpack.c.l.b16 %v82
    %v449 = vunpack.c.l.b16 %v83
    %v450 = vunpack.c.l.b16 %v84
    %v451 = vunpack.c.l.b16 %v85
    %v452 = vunpack.c.l.b16 %v86
    %v453 = vunpack.c.l.b16 %v87
    %v454 = vunpack.c.l.b16 %v88
    %v455 = vunpack.c.l.b16 %v89
    %v456 = vunpack.c.l.b16 %v90
    %v457 = vunpack.c.l.b16 %v91
    %v458 = vunpack.c.l.b16 %v92
    %v459 = vunpack.c.l.b16 %v93
    %v460 = vunpack.c.l.b16 %v94
    %v461 = vunpack.c.l.b16 %v95
    %v462 = vunpack.c.l.b16 %v96
    %v463 = vunpack.c.l.b16 %v97
    %v464 = vpack.c.b16 %v449, %v448
    %v465 = vpack.c.b16 %v451, %v450
    %v466 = vpack.c.b16 %v453, %v452
    %v467 = vpack.c.b16 %v455, %v454
    %v468 = vpack.c.b16 %v457, %v456
    %v469 = vpack.c.b16 %v459, %v458
    %v470 = vpack.c.b16 %v461, %v460
    %v471 = vpack.c.b16 %v463, %v462
    %480 = vmatprep.subr.bf16.mxu0 0
    %481 = vmatpush1.bf16.xpose.msra.mxu0 %v424
    %482 = vmatprep.subr.bf16.mxu0 0
    %483 = vmatpush1.bf16.xpose.msra.mxu0 %v425
    %484 = vmatprep.subr.bf16.mxu0 0
    %485 = vmatpush1.bf16.xpose.msra.mxu0 %v426
    %486 = vmatprep.subr.bf16.mxu0 0
    %487 = vmatpush1.bf16.xpose.msra.mxu0 %v427
    %488 = vmatprep.subr.bf16.mxu0 0
    %489 = vmatpush1.bf16.xpose.msra.mxu0 %v428
    %490 = vmatprep.subr.bf16.mxu0 0
    %491 = vmatpush1.bf16.xpose.msra.mxu0 %v429
    %492 = vmatprep.subr.bf16.mxu0 0
    %493 = vmatpush1.bf16.xpose.msra.mxu0 %v430
    %494 = vmatprep.subr.bf16.mxu0 0
    %495 = vmatpush1.bf16.xpose.msra.mxu0 %v431
    %496 = vmatprep.subr.bf16.mxu0 0
    %497 = vmatpush1.bf16.xpose.msra.mxu0 0
    %498 = vmatprep.subr.bf16.mxu0 0
    %499 = vmatpush1.bf16.xpose.msra.mxu0 0
    %500 = vmatprep.subr.bf16.mxu0 0
    %501 = vmatpush1.bf16.xpose.msra.mxu0 0
    %502 = vmatprep.subr.bf16.mxu0 0
    %503 = vmatpush1.bf16.xpose.msra.mxu0 0
    %504 = vmatprep.subr.bf16.mxu0 0
    %505 = vmatpush1.bf16.xpose.msra.mxu0 0
    %506 = vmatprep.subr.bf16.mxu0 0
    %507 = vmatpush1.bf16.xpose.msra.mxu0 0
    %508 = vmatprep.subr.bf16.mxu0 0
    %509 = vmatpush1.bf16.xpose.msra.mxu0 0
    %510 = vmatprep.subr.bf16.mxu0 0
    %511 = vmatpush1.bf16.xpose.msra.mxu0 0
    %512 = vmatprep.mubr.bf16.mxu0 0
    %513 = vmatmul.mubr.bf16.gmra.mrb[0].mxu0 %v464
    %v514 = vpop.f32.mrb[0].mxu0
    %v515 = vadd.f32 0.0, %v514
    %v516 = vpop.f32.mrb[0].mxu0
    %v517 = vpop.f32.mrb[0].mxu0
    %v518 = vadd.f32 0.0, %v517
    %v519 = vpop.f32.mrb[0].mxu0
    %520 = vmatprep.mubr.bf16.mxu0 0
    %521 = vmatmul.mubr.bf16.gmra.mrb[0].mxu0 %v465
    %v522 = vpop.f32.mrb[0].mxu0
    %v523 = vadd.f32 0.0, %v522
    %v524 = vpop.f32.mrb[0].mxu0
    %v525 = vpop.f32.mrb[0].mxu0
    %v526 = vadd.f32 0.0, %v525
    %v527 = vpop.f32.mrb[0].mxu0
    %528 = vmatprep.mubr.bf16.mxu0 0
    %529 = vmatmul.mubr.bf16.gmra.mrb[0].mxu0 %v466
    %v530 = vpop.f32.mrb[0].mxu0
    %v531 = vadd.f32 0.0, %v530
    %v532 = vpop.f32.mrb[0].mxu0
    %v533 = vpop.f32.mrb[0].mxu0
    %v534 = vadd.f32 0.0, %v533
    %v535 = vpop.f32.mrb[0].mxu0
    %536 = vmatprep.mubr.bf16.mxu0 0
    %537 = vmatmul.mubr.bf16.gmra.mrb[0].mxu0 %v467
    %v538 = vpop.f32.mrb[0].mxu0
    %v539 = vadd.f32 0.0, %v538
    %v540 = vpop.f32.mrb[0].mxu0
    %v541 = vpop.f32.mrb[0].mxu0
    %v542 = vadd.f32 0.0, %v541
    %v543 = vpop.f32.mrb[0].mxu0
    %544 = vmatprep.mubr.bf16.mxu0 0
    %545 = vmatmul.mubr.bf16.gmra.mrb[0].mxu0 %v468
    %v546 = vpop.f32.mrb[0].mxu0
    %v547 = vadd.f32 0.0, %v546
    %v548 = vpop.f32.mrb[0].mxu0
    %v549 = vpop.f32.mrb[0].mxu0
    %v550 = vadd.f32 0.0, %v549
    %v551 = vpop.f32.mrb[0].mxu0
    %552 = vmatprep.mubr.bf16.mxu0 0
    %553 = vmatmul.mubr.bf16.gmra.mrb[0].mxu0 %v469
    %v554 = vpop.f32.mrb[0].mxu0
    %v555 = vadd.f32 0.0, %v554
    %v556 = vpop.f32.mrb[0].mxu0
    %v557 = vpop.f32.mrb[0].mxu0
    %v558 = vadd.f32 0.0, %v557
    %v559 = vpop.f32.mrb[0].mxu0
    %560 = vmatprep.mubr.bf16.mxu0 0
    %561 = vmatmul.mubr.bf16.gmra.mrb[0].mxu0 %v470
    %v562 = vpop.f32.mrb[0].mxu0
    %v563 = vadd.f32 0.0, %v562
    %v564 = vpop.f32.mrb[0].mxu0
    %v565 = vpop.f32.mrb[0].mxu0
    %v566 = vadd.f32 0.0, %v565
    %v567 = vpop.f32.mrb[0].mxu0
    %568 = vmatprep.mubr.bf16.mxu0 0
    %569 = vmatmul.mubr.bf16.gmra.mrb[0].mxu0 %v471
    %v570 = vpop.f32.mrb[0].mxu0
    %v571 = vadd.f32 0.0, %v570
    %v572 = vpop.f32.mrb[0].mxu0
    %v573 = vpop.f32.mrb[0].mxu0
    %v574 = vadd.f32 0.0, %v573
    %v575 = vpop.f32.mrb[0].mxu0
    %576 = vdwg.mxu0
    %vm577 = vcmp.gt.f32.partialorder %v515, 0.0
    %vm578 = vcmp.gt.f32.partialorder %v518, 0.0
    %vm579 = vcmp.gt.f32.partialorder %v523, 0.0
    %vm580 = vcmp.gt.f32.partialorder %v526, 0.0
    %vm581 = vcmp.gt.f32.partialorder %v531, 0.0
    %vm582 = vcmp.gt.f32.partialorder %v534, 0.0
    %vm583 = vcmp.gt.f32.partialorder %v539, 0.0
    %vm584 = vcmp.gt.f32.partialorder %v542, 0.0
    %vm585 = vcmp.gt.f32.partialorder %v547, 0.0
    %vm586 = vcmp.gt.f32.partialorder %v550, 0.0
    %vm587 = vcmp.gt.f32.partialorder %v555, 0.0
    %vm588 = vcmp.gt.f32.partialorder %v558, 0.0
    %vm589 = vcmp.gt.f32.partialorder %v563, 0.0
    %vm590 = vcmp.gt.f32.partialorder %v566, 0.0
    %vm591 = vcmp.gt.f32.partialorder %v571, 0.0
    %vm592 = vcmp.gt.f32.partialorder %v574, 0.0
    %v593 = vmul.f32 %v515, 0.1
    %v594 = vmul.f32 %v518, 0.1
    %v595 = vmul.f32 %v523, 0.1
    %v596 = vmul.f32 %v526, 0.1
    %v597 = vmul.f32 %v531, 0.1
    %v598 = vmul.f32 %v534, 0.1
    %v599 = vmul.f32 %v539, 0.1
    %v600 = vmul.f32 %v542, 0.1
    %v601 = vmul.f32 %v547, 0.1
    %v602 = vmul.f32 %v550, 0.1
    %v603 = vmul.f32 %v555, 0.1
    %v604 = vmul.f32 %v558, 0.1
    %v605 = vmul.f32 %v563, 0.1
    %v606 = vmul.f32 %v566, 0.1
    %v607 = vmul.f32 %v571, 0.1
    %v608 = vmul.f32 %v574, 0.1
    %v609 = vsel %vm577, %v515, %v593
    %v610 = vsel %vm578, %v518, %v594
    %v611 = vsel %vm579, %v523, %v595
    %v612 = vsel %vm580, %v526, %v596
    %v613 = vsel %vm581, %v531, %v597
    %v614 = vsel %vm582, %v534, %v598
    %v615 = vsel %vm583, %v539, %v599
    %v616 = vsel %vm584, %v542, %v600
    %v617 = vsel %vm585, %v547, %v601
    %v618 = vsel %vm586, %v550, %v602
    %v619 = vsel %vm587, %v555, %v603
    %v620 = vsel %vm588, %v558, %v604
    %v621 = vsel %vm589, %v563, %v605
    %v622 = vsel %vm590, %v566, %v606
    %v623 = vsel %vm591, %v571, %v607
    %v624 = vsel %vm592, %v574, %v608
    %v625 = vpack.c.bf16 %v610, %v609
    %v626 = vpack.c.bf16 %v612, %v611
    %v627 = vpack.c.bf16 %v614, %v613
    %v628 = vpack.c.bf16 %v616, %v615
    %v629 = vpack.c.bf16 %v618, %v617
    %v630 = vpack.c.bf16 %v620, %v619
    %v631 = vpack.c.bf16 %v622, %v621
    %v632 = vpack.c.bf16 %v624, %v623
    %633 = vmatprep.subr.bf16.mxu0 0
    %634 = vmatpush1.bf16.msra.mxu0 %v625
    %635 = vmatprep.subr.bf16.mxu0 0
    %636 = vmatpush1.bf16.msra.mxu0 %v626
    %637 = vmatprep.subr.bf16.mxu0 0
    %638 = vmatpush1.bf16.msra.mxu0 %v627
    %639 = vmatprep.subr.bf16.mxu0 0
    %640 = vmatpush1.bf16.msra.mxu0 %v628
    %641 = vmatprep.subr.bf16.mxu0 0
    %642 = vmatpush1.bf16.msra.mxu0 %v629
    %643 = vmatprep.subr.bf16.mxu0 0
    %644 = vmatpush1.bf16.msra.mxu0 %v630
    %645 = vmatprep.subr.bf16.mxu0 0
    %646 = vmatpush1.bf16.msra.mxu0 %v631
    %647 = vmatprep.subr.bf16.mxu0 0
    %648 = vmatpush1.bf16.msra.mxu0 %v632
    %649 = vmatprep.subr.bf16.mxu0 0
    %650 = vmatpush1.bf16.msra.mxu0 0
    %651 = vmatprep.subr.bf16.mxu0 0
    %652 = vmatpush1.bf16.msra.mxu0 0
    %653 = vmatprep.subr.bf16.mxu0 0
    %654 = vmatpush1.bf16.msra.mxu0 0
    %655 = vmatprep.subr.bf16.mxu0 0
    %656 = vmatpush1.bf16.msra.mxu0 0
    %657 = vmatprep.subr.bf16.mxu0 0
    %658 = vmatpush1.bf16.msra.mxu0 0
    %659 = vmatprep.subr.bf16.mxu0 0
    %660 = vmatpush1.bf16.msra.mxu0 0
    %661 = vmatprep.subr.bf16.mxu0 0
    %662 = vmatpush1.bf16.msra.mxu0 0
    %663 = vmatprep.subr.bf16.mxu0 0
    %664 = vmatpush1.bf16.msra.mxu0 0
    %665 = vmatprep.mubr.bf16.mxu0 0
    %666 = vmatmul.mubr.bf16.gmra.mrb[0].mxu0 %v98
    %v667 = vpop.f32.mrb[0].mxu0
    %v668 = vadd.f32 0.0, %v667
    %v669 = vpop.f32.mrb[0].mxu0
    %v670 = vpop.f32.mrb[0].mxu0
    %v671 = vpop.f32.mrb[0].mxu0
    %672 = vdwg.mxu0
    %673 = vst [vmem:[%s3] sm:$0xff] %v668
    // Predicated region
    $region18: #{twin_q_forward.1} parent=1 // pred_check
      _
    $region19: #{twin_q_forward.1} parent=1 // pred_check_branch
      %675 = sbr.rel (0) target = $region21
    $region20: #{twin_q_forward.1} parent=1 // pred_region
      _
    $region21: #{twin_q_forward.1} parent=1 // pred_fallthru
      _
    // Predicated region
    $region22: #{twin_q_forward.1} parent=1 // pred_check
      _
    $region23: #{twin_q_forward.1} parent=1 // pred_check_branch
      %677 = sbr.rel (0) target = $region25
    $region24: #{twin_q_forward.1} parent=1 // pred_region
      _
    $region25: #{twin_q_forward.1} parent=1 // pred_fallthru
      _
    %678 = vsyncpa [#allocation3], 1

</llo_original>
